<compile_context>
chip_gen: v7x
topology: tpu7x:2x2x1
jax: 0.10.0
libtpu: 0.0.40
codegen_flags: <defaults>
</compile_context>

<pallas_src>
import jax
import jax.numpy as jnp
from jax.experimental import pallas as pl
from jax.experimental.pallas import tpu as pltpu

HIDDEN = 30
HIDDEN_PAD = 32          # 30 -> 32 so activation tiles are sublane-aligned (fp32: 8)
NUM_HIDDEN_LAYERS = 4    # the four 30x30 hidden Linear layers


def _mlp_kernel(x_ref, w1_ref, b1_ref, wh_ref, bh_ref, w6_ref, b6_ref, o_ref):
    """Fused ValueNetwork forward for one batch tile (batch on the lane axis).

      x_ref  : (S, bm)                       input tile  (features x batch)
      w1_ref : (HIDDEN_PAD, S)               first-layer weight (PyTorch [out, in])
      b1_ref : (HIDDEN_PAD, 1)
      wh_ref : (4, HIDDEN_PAD, HIDDEN_PAD)   stacked hidden-layer weights
      bh_ref : (4, HIDDEN_PAD, 1)            stacked hidden-layer biases
      w6_ref : (1, HIDDEN_PAD)               final-layer weight
      b6_ref : (1, 1)
      o_ref  : (1, bm)                       lane-dense output tile
    """
    x = x_ref[...]

    # Layer 1: [32, S] @ [S, bm] -> [32, bm]
    h = jnp.dot(w1_ref[...], x, preferred_element_type=jnp.float32) + b1_ref[...]
    h = jnp.maximum(h, 0.0)

    # Four identical hidden layers, statically unrolled.
    for l in range(NUM_HIDDEN_LAYERS):
        h = jnp.dot(wh_ref[l], h, preferred_element_type=jnp.float32) + bh_ref[l]
        h = jnp.maximum(h, 0.0)

    # Final layer (no activation): [1, 32] @ [32, bm] -> [1, bm]
    out = jnp.dot(w6_ref[...], h, preferred_element_type=jnp.float32) + b6_ref[...]
    o_ref[...] = out.astype(o_ref.dtype)


def value_network_forward(x, params, *, batch_tile=None):
    """x: [B, state_space] f32 -> [B, 1] f32.

    params: list of 6 (weight [out, in], bias [out]) pairs (PyTorch layout).
    """
    B, S = x.shape

    # Lane-dense batch tile: multiple of 128, up to 512, never bigger than
    # the (padded) batch. Ragged batches are handled by zero-padding.
    if batch_tile is None:
        bm = min(512, 128 * pl.cdiv(B, 128))
    else:
        bm = batch_tile
    assert bm % 128 == 0, "batch_tile must be a multiple of 128 (lane width)"

    b_pad = bm * pl.cdiv(B, bm)

    # Pad batch and put it on the lane (last) axis: x_t is [S, b_pad].
    x_pad = jnp.zeros((b_pad, S), x.dtype).at[:B].set(x)
    x_t = x_pad.T

    # Pack weights: PyTorch-native [out, in]; pad HIDDEN 30 -> 32 with zeros.
    (w1, b1) = params[0]
    h_layers = params[1:1 + NUM_HIDDEN_LAYERS]
    (w6, b6) = params[5]

    def pad_rows(a, rows):
        return jnp.zeros((rows,) + a.shape[1:], a.dtype).at[:a.shape[0]].set(a)

    w1p = pad_rows(w1, HIDDEN_PAD)                                   # [32, S]
    b1p = pad_rows(b1.reshape(-1, 1), HIDDEN_PAD)                    # [32, 1]
    whp = jnp.stack([
        jnp.zeros((HIDDEN_PAD, HIDDEN_PAD), w.dtype).at[:HIDDEN, :HIDDEN].set(w)
        for (w, _) in h_layers])                                     # [4, 32, 32]
    bhp = jnp.stack([pad_rows(b.reshape(-1, 1), HIDDEN_PAD)
                     for (_, b) in h_layers])                        # [4, 32, 1]
    w6p = jnp.zeros((1, HIDDEN_PAD), w6.dtype).at[:, :HIDDEN].set(w6)  # [1, 32]
    b6p = b6.reshape(1, 1)                                           # [1, 1]

    def full_spec(shape):
        return pl.BlockSpec(shape, lambda i: (0,) * len(shape))

    out_t = pl.pallas_call(
        _mlp_kernel,
        out_shape=jax.ShapeDtypeStruct((1, b_pad), jnp.float32),
        grid_spec=pltpu.PrefetchScalarGridSpec(
            num_scalar_prefetch=0,
            grid=(b_pad // bm,),
            in_specs=[
                pl.BlockSpec((S, bm), lambda i: (0, i)),   # input: lane-dense tile
                full_spec(w1p.shape),
                full_spec(b1p.shape),
                full_spec(whp.shape),
                full_spec(bhp.shape),
                full_spec(w6p.shape),
                full_spec(b6p.shape),
            ],
            out_specs=pl.BlockSpec((1, bm), lambda i: (0, i)),  # unmasked lane-dense store
        ),
        compiler_params=pltpu.CompilerParams(
            dimension_semantics=("parallel",)),
    )(x_t, w1p, b1p, whp, bhp, w6p, b6p)

    # Back to the module's [B, 1] output (drop batch padding).
    return out_t[0, :B].reshape(B, 1)


def init_params(key, state_space):
    """PyTorch nn.Linear-style params: weight [out, in], bias [out]."""
    sizes = [(state_space, HIDDEN)] + [(HIDDEN, HIDDEN)] * NUM_HIDDEN_LAYERS + [(HIDDEN, 1)]
    params = []
    for (fan_in, fan_out) in sizes:
        key, kw, kb = jax.random.split(key, 3)
        bound = 1.0 / jnp.sqrt(fan_in)
        w = jax.random.uniform(kw, (fan_out, fan_in), jnp.float32, -bound, bound)
        b = jax.random.uniform(kb, (fan_out,), jnp.float32, -bound, bound)
        params.append((w, b))
    return params


def reference_forward(x, params):
    h = x
    for i, (w, b) in enumerate(params):
        h = h @ w.T + b
        if i < len(params) - 1:
            h = jnp.maximum(h, 0.0)
    return h


if __name__ == "__main__":
    key = jax.random.PRNGKey(0)
    k_x, k_p = jax.random.split(key)

    batch, state_space = 4, 8
    x = jax.random.normal(k_x, (batch, state_space), jnp.float32)
    params = init_params(k_p, state_space)

    out = value_network_forward(x, params)
    out = jax.block_until_ready(out)

    ref = reference_forward(x, params)
    assert out.shape == (batch, 1)
    assert jnp.allclose(out, ref, atol=1e-5, rtol=1e-5), (out, ref)

    print("KERNEL_OK")
</pallas_src>

<mosaic_0001>
module attributes {stable_mosaic.version = 11 : i64} {
  func.func @_mlp_kernel(%arg0: i32, %arg1: memref<8x128xf32, #tpu.memory_space<vmem>>, %arg2: memref<32x8xf32, #tpu.memory_space<vmem>>, %arg3: memref<32x1xf32, #tpu.memory_space<vmem>>, %arg4: memref<4x32x32xf32, #tpu.memory_space<vmem>>, %arg5: memref<4x32x1xf32, #tpu.memory_space<vmem>>, %arg6: memref<1x32xf32, #tpu.memory_space<vmem>>, %arg7: memref<1x1xf32, #tpu.memory_space<vmem>>, %arg8: memref<1x128xf32, #tpu.memory_space<vmem>>) attributes {dimension_semantics = [#tpu.dimension_semantics<parallel>], iteration_bounds = array<i64: 1>, scalar_prefetch = 0 : i64, scratch_operands = 0 : i64, tpu.core_type = #tpu.core_type<tc>, window_params = [{transform_indices = @transform_0, window_bounds = array<i64: 8, 128>}, {pipeline_mode = #tpu.pipeline_mode<synchronous>, transform_indices = @transform_1, window_bounds = array<i64: 32, 8>}, {pipeline_mode = #tpu.pipeline_mode<synchronous>, transform_indices = @transform_2, window_bounds = array<i64: 32, 1>}, {pipeline_mode = #tpu.pipeline_mode<synchronous>, transform_indices = @transform_3, window_bounds = array<i64: 4, 32, 32>}, {pipeline_mode = #tpu.pipeline_mode<synchronous>, transform_indices = @transform_4, window_bounds = array<i64: 4, 32, 1>}, {pipeline_mode = #tpu.pipeline_mode<synchronous>, transform_indices = @transform_5, window_bounds = array<i64: 1, 32>}, {pipeline_mode = #tpu.pipeline_mode<synchronous>, transform_indices = @transform_6, window_bounds = array<i64: 1, 1>}, {transform_indices = @transform_7, window_bounds = array<i64: 1, 128>}]} {
    %c0 = arith.constant 0 : index
    %c0_0 = arith.constant 0 : index
    %0 = vector.load %arg1[%c0, %c0_0] : memref<8x128xf32, #tpu.memory_space<vmem>>, vector<8x128xf32>
    %c0_1 = arith.constant 0 : index
    %c0_2 = arith.constant 0 : index
    %1 = vector.load %arg2[%c0_1, %c0_2] : memref<32x8xf32, #tpu.memory_space<vmem>>, vector<32x8xf32>
    %cst = arith.constant dense<0.000000e+00> : vector<32x128xf32>
    %2 = tpu.matmul %1, %0, %cst {dimension_numbers = #tpu.dot_dimension_numbers<[1], [0], [0], [1], [0, 0, 1, 1], [], []>} : vector<32x8xf32>, vector<8x128xf32>, vector<32x128xf32> -> vector<32x128xf32>
    %c0_3 = arith.constant 0 : index
    %c0_4 = arith.constant 0 : index
    %3 = vector.load %arg3[%c0_3, %c0_4] : memref<32x1xf32, #tpu.memory_space<vmem>>, vector<32x1xf32>
    %4 = vector.broadcast %3 : vector<32x1xf32> to vector<32x128xf32>
    %5 = arith.addf %2, %4 : vector<32x128xf32>
    %cst_5 = arith.constant 0.000000e+00 : f32
    %6 = vector.broadcast %cst_5 : f32 to vector<32x128xf32>
    %7 = arith.maximumf %5, %6 : vector<32x128xf32>
    %c0_6 = arith.constant 0 : index
    %c0_7 = arith.constant 0 : index
    %c0_8 = arith.constant 0 : index
    %8 = vector.load %arg4[%c0_6, %c0_7, %c0_8] : memref<4x32x32xf32, #tpu.memory_space<vmem>>, vector<1x32x32xf32>
    %9 = vector.shape_cast %8 : vector<1x32x32xf32> to vector<32x32xf32>
    %cst_9 = arith.constant dense<0.000000e+00> : vector<32x128xf32>
    %10 = tpu.matmul %9, %7, %cst_9 {dimension_numbers = #tpu.dot_dimension_numbers<[1], [0], [0], [1], [0, 0, 1, 1], [], []>} : vector<32x32xf32>, vector<32x128xf32>, vector<32x128xf32> -> vector<32x128xf32>
    %c0_10 = arith.constant 0 : index
    %c0_11 = arith.constant 0 : index
    %c0_12 = arith.constant 0 : index
    %11 = vector.load %arg5[%c0_10, %c0_11, %c0_12] : memref<4x32x1xf32, #tpu.memory_space<vmem>>, vector<1x32x1xf32>
    %12 = vector.shape_cast %11 : vector<1x32x1xf32> to vector<32x1xf32>
    %13 = vector.broadcast %12 : vector<32x1xf32> to vector<32x128xf32>
    %14 = arith.addf %10, %13 : vector<32x128xf32>
    %cst_13 = arith.constant 0.000000e+00 : f32
    %15 = vector.broadcast %cst_13 : f32 to vector<32x128xf32>
    %16 = arith.maximumf %14, %15 : vector<32x128xf32>
    %c1 = arith.constant 1 : index
    %c0_14 = arith.constant 0 : index
    %c0_15 = arith.constant 0 : index
    %17 = vector.load %arg4[%c1, %c0_14, %c0_15] : memref<4x32x32xf32, #tpu.memory_space<vmem>>, vector<1x32x32xf32>
    %18 = vector.shape_cast %17 : vector<1x32x32xf32> to vector<32x32xf32>
    %cst_16 = arith.constant dense<0.000000e+00> : vector<32x128xf32>
    %19 = tpu.matmul %18, %16, %cst_16 {dimension_numbers = #tpu.dot_dimension_numbers<[1], [0], [0], [1], [0, 0, 1, 1], [], []>} : vector<32x32xf32>, vector<32x128xf32>, vector<32x128xf32> -> vector<32x128xf32>
    %c1_17 = arith.constant 1 : index
    %c0_18 = arith.constant 0 : index
    %c0_19 = arith.constant 0 : index
    %20 = vector.load %arg5[%c1_17, %c0_18, %c0_19] : memref<4x32x1xf32, #tpu.memory_space<vmem>>, vector<1x32x1xf32>
    %21 = vector.shape_cast %20 : vector<1x32x1xf32> to vector<32x1xf32>
    %22 = vector.broadcast %21 : vector<32x1xf32> to vector<32x128xf32>
    %23 = arith.addf %19, %22 : vector<32x128xf32>
    %cst_20 = arith.constant 0.000000e+00 : f32
    %24 = vector.broadcast %cst_20 : f32 to vector<32x128xf32>
    %25 = arith.maximumf %23, %24 : vector<32x128xf32>
    %c2 = arith.constant 2 : index
    %c0_21 = arith.constant 0 : index
    %c0_22 = arith.constant 0 : index
    %26 = vector.load %arg4[%c2, %c0_21, %c0_22] : memref<4x32x32xf32, #tpu.memory_space<vmem>>, vector<1x32x32xf32>
    %27 = vector.shape_cast %26 : vector<1x32x32xf32> to vector<32x32xf32>
    %cst_23 = arith.constant dense<0.000000e+00> : vector<32x128xf32>
    %28 = tpu.matmul %27, %25, %cst_23 {dimension_numbers = #tpu.dot_dimension_numbers<[1], [0], [0], [1], [0, 0, 1, 1], [], []>} : vector<32x32xf32>, vector<32x128xf32>, vector<32x128xf32> -> vector<32x128xf32>
    %c2_24 = arith.constant 2 : index
    %c0_25 = arith.constant 0 : index
    %c0_26 = arith.constant 0 : index
    %29 = vector.load %arg5[%c2_24, %c0_25, %c0_26] : memref<4x32x1xf32, #tpu.memory_space<vmem>>, vector<1x32x1xf32>
    %30 = vector.shape_cast %29 : vector<1x32x1xf32> to vector<32x1xf32>
    %31 = vector.broadcast %30 : vector<32x1xf32> to vector<32x128xf32>
    %32 = arith.addf %28, %31 : vector<32x128xf32>
    %cst_27 = arith.constant 0.000000e+00 : f32
    %33 = vector.broadcast %cst_27 : f32 to vector<32x128xf32>
    %34 = arith.maximumf %32, %33 : vector<32x128xf32>
    %c3 = arith.constant 3 : index
    %c0_28 = arith.constant 0 : index
    %c0_29 = arith.constant 0 : index
    %35 = vector.load %arg4[%c3, %c0_28, %c0_29] : memref<4x32x32xf32, #tpu.memory_space<vmem>>, vector<1x32x32xf32>
    %36 = vector.shape_cast %35 : vector<1x32x32xf32> to vector<32x32xf32>
    %cst_30 = arith.constant dense<0.000000e+00> : vector<32x128xf32>
    %37 = tpu.matmul %36, %34, %cst_30 {dimension_numbers = #tpu.dot_dimension_numbers<[1], [0], [0], [1], [0, 0, 1, 1], [], []>} : vector<32x32xf32>, vector<32x128xf32>, vector<32x128xf32> -> vector<32x128xf32>
    %c3_31 = arith.constant 3 : index
    %c0_32 = arith.constant 0 : index
    %c0_33 = arith.constant 0 : index
    %38 = vector.load %arg5[%c3_31, %c0_32, %c0_33] : memref<4x32x1xf32, #tpu.memory_space<vmem>>, vector<1x32x1xf32>
    %39 = vector.shape_cast %38 : vector<1x32x1xf32> to vector<32x1xf32>
    %40 = vector.broadcast %39 : vector<32x1xf32> to vector<32x128xf32>
    %41 = arith.addf %37, %40 : vector<32x128xf32>
    %cst_34 = arith.constant 0.000000e+00 : f32
    %42 = vector.broadcast %cst_34 : f32 to vector<32x128xf32>
    %43 = arith.maximumf %41, %42 : vector<32x128xf32>
    %c0_35 = arith.constant 0 : index
    %c0_36 = arith.constant 0 : index
    %44 = vector.load %arg6[%c0_35, %c0_36] : memref<1x32xf32, #tpu.memory_space<vmem>>, vector<1x32xf32>
    %cst_37 = arith.constant dense<0.000000e+00> : vector<1x128xf32>
    %45 = tpu.matmul %44, %43, %cst_37 {dimension_numbers = #tpu.dot_dimension_numbers<[1], [0], [0], [1], [0, 0, 1, 1], [], []>} : vector<1x32xf32>, vector<32x128xf32>, vector<1x128xf32> -> vector<1x128xf32>
    %c0_38 = arith.constant 0 : index
    %c0_39 = arith.constant 0 : index
    %46 = vector.load %arg7[%c0_38, %c0_39] : memref<1x1xf32, #tpu.memory_space<vmem>>, vector<1x1xf32>
    %47 = vector.broadcast %46 : vector<1x1xf32> to vector<1x128xf32>
    %48 = arith.addf %45, %47 : vector<1x128xf32>
    %c0_40 = arith.constant 0 : index
    %c0_41 = arith.constant 0 : index
    %49 = vector.load %arg8[%c0_40, %c0_41] : memref<1x128xf32, #tpu.memory_space<vmem>>, vector<1x128xf32>
    tpu.vector_store %arg8[%c0_40, %c0_41], %48 {strides = array<i32>} : memref<1x128xf32, #tpu.memory_space<vmem>>, vector<1x128xf32>,
    return
  }
  func.func @transform_0(%arg0: i32) -> (i32, i32) {
    %c0_i32 = arith.constant 0 : i32
    %c0_i32_0 = arith.constant 0 : i32
    return %c0_i32, %arg0 : i32, i32
  }
  func.func @transform_1(%arg0: i32) -> (i32, i32) {
    %c0_i32 = arith.constant 0 : i32
    %c0_i32_0 = arith.constant 0 : i32
    %c0_i32_1 = arith.constant 0 : i32
    return %c0_i32, %c0_i32_0 : i32, i32
  }
  func.func @transform_2(%arg0: i32) -> (i32, i32) {
    %c0_i32 = arith.constant 0 : i32
    %c0_i32_0 = arith.constant 0 : i32
    %c0_i32_1 = arith.constant 0 : i32
    return %c0_i32, %c0_i32_0 : i32, i32
  }
  func.func @transform_3(%arg0: i32) -> (i32, i32, i32) {
    %c0_i32 = arith.constant 0 : i32
    %c0_i32_0 = arith.constant 0 : i32
    %c0_i32_1 = arith.constant 0 : i32
    %c0_i32_2 = arith.constant 0 : i32
    return %c0_i32, %c0_i32_0, %c0_i32_1 : i32, i32, i32
  }
  func.func @transform_4(%arg0: i32) -> (i32, i32, i32) {
    %c0_i32 = arith.constant 0 : i32
    %c0_i32_0 = arith.constant 0 : i32
    %c0_i32_1 = arith.constant 0 : i32
    %c0_i32_2 = arith.constant 0 : i32
    return %c0_i32, %c0_i32_0, %c0_i32_1 : i32, i32, i32
  }
  func.func @transform_5(%arg0: i32) -> (i32, i32) {
    %c0_i32 = arith.constant 0 : i32
    %c0_i32_0 = arith.constant 0 : i32
    %c0_i32_1 = arith.constant 0 : i32
    return %c0_i32, %c0_i32_0 : i32, i32
  }
  func.func @transform_6(%arg0: i32) -> (i32, i32) {
    %c0_i32 = arith.constant 0 : i32
    %c0_i32_0 = arith.constant 0 : i32
    %c0_i32_1 = arith.constant 0 : i32
    return %c0_i32, %c0_i32_0 : i32, i32
  }
  func.func @transform_7(%arg0: i32) -> (i32, i32) {
    %c0_i32 = arith.constant 0 : i32
    %c0_i32_0 = arith.constant 0 : i32
    return %c0_i32, %arg0 : i32, i32
  }
}

</mosaic_0001>

<llo_original>
// kernel: tpu_custom_call.1
$region0: #{tpu_custom_call.1}
  #allocation0 [shape = 'u32[]', space=smem, size = 0x4, offset = 0x4, fixed_abs, tag = 'smem constant byte address 0x4 - core index']
  #allocation1 [shape = 'u32[144,128]{1,0:T(1,128)}', space=vmem, size = 0x12000, scoped, tag = 'internal scratch']
  #allocation2 [shape = 'f32[1,1]{1,0:T(1,128)S(1)}', space=vmem, size = 0x200, scoped, tag = 'scoped memory for tpu_custom_call.1']
  %s0 = inlined_call_operand.vmem [shape: f32[8,128], index: 0, kind: input, shape index: {}]
  %s1 = inlined_call_operand.vmem [shape: f32[32,8], index: 1, kind: input, shape index: {}]
  %s2 = inlined_call_operand.vmem [shape: f32[32,1], index: 2, kind: input, shape index: {}]
  %s3 = inlined_call_operand.vmem [shape: f32[4,32,32], index: 3, kind: input, shape index: {}]
  %s4 = inlined_call_operand.vmem [shape: f32[4,32,1], index: 4, kind: input, shape index: {}]
  %s5 = inlined_call_operand.vmem [shape: f32[1,32], index: 5, kind: input, shape index: {}]
  %s6 = inlined_call_operand.<no memory space> [shape: f32[1,1], index: 6, kind: input, shape index: {}]
  %s7 = inlined_call_operand.hbm [shape: f32[1,128], index: 7, kind: output, shape index: {}]
  %s8 = sld [smem:[#allocation0]]
  $region38: #{tpu_custom_call.1} parent=0
    _
  %s10 = ssub.s32 1, %s8
  %s11 = scalar_select 0, %s10, %s8
  %v12 = vstv %s6
  %13 = vst [vmem:[#allocation2] sm:$0x1] %v12
  $region1: #{tpu_custom_call.1} parent=0
    #allocation3 [shape = 'u8[512]{0}', space=vmem, size = 0x400, scoped, tag = 'output window, operand 0, single buffered']
    #allocation4 [shape = 's32[1]{0}', space=sflag, size = 0x4, scoped, tag = 'scoped memory for tpu_custom_call.1']
    %14 = vsyncpa [#allocation4], 0
    // Predicated region
    $region2: #{tpu_custom_call.1} parent=1 // pred_check
      _
    $region3: #{tpu_custom_call.1} parent=1 // pred_check_branch
      %16 = sbr.rel (0) target = $region5
    $region4: #{tpu_custom_call.1} parent=1 // pred_region
      _
    $region5: #{tpu_custom_call.1} parent=1 // pred_fallthru
      _
    // Predicated region
    $region6: #{tpu_custom_call.1} parent=1 // pred_check
      _
    $region7: #{tpu_custom_call.1} parent=1 // pred_check_branch
      %18 = sbr.rel (0) target = $region9
    $region8: #{tpu_custom_call.1} parent=1 // pred_region
      _
    $region9: #{tpu_custom_call.1} parent=1 // pred_fallthru
      _
    // Predicated region
    $region10: #{tpu_custom_call.1} parent=1 // pred_check
      _
    $region11: #{tpu_custom_call.1} parent=1 // pred_check_branch
      %20 = sbr.rel (0) target = $region13
    $region12: #{tpu_custom_call.1} parent=1 // pred_region
      _
    $region13: #{tpu_custom_call.1} parent=1 // pred_fallthru
      _
    // Predicated region
    $region14: #{tpu_custom_call.1} parent=1 // pred_check
      _
    $region15: #{tpu_custom_call.1} parent=1 // pred_check_branch
      %22 = sbr.rel (0) target = $region17
    $region16: #{tpu_custom_call.1} parent=1 // pred_region
      _
    $region17: #{tpu_custom_call.1} parent=1 // pred_fallthru
      _
    // Predicated region
    $region18: #{tpu_custom_call.1} parent=1 // pred_check
      _
    $region19: #{tpu_custom_call.1} parent=1 // pred_check_branch
      %24 = sbr.rel (0) target = $region21
    $region20: #{tpu_custom_call.1} parent=1 // pred_region
      _
    $region21: #{tpu_custom_call.1} parent=1 // pred_fallthru
      _
    // Predicated region
    $region22: #{tpu_custom_call.1} parent=1 // pred_check
      _
    $region23: #{tpu_custom_call.1} parent=1 // pred_check_branch
      %26 = sbr.rel (0) target = $region25
    $region24: #{tpu_custom_call.1} parent=1 // pred_region
      _
    $region25: #{tpu_custom_call.1} parent=1 // pred_fallthru
      _
    // Predicated region
    $region26: #{tpu_custom_call.1} parent=1 // pred_check
      _
    $region27: #{tpu_custom_call.1} parent=1 // pred_check_branch
      %28 = sbr.rel (0) target = $region29
    $region28: #{tpu_custom_call.1} parent=1 // pred_region
      _
    $region29: #{tpu_custom_call.1} parent=1 // pred_fallthru
      _
    %v29 = vld [vmem:[%s0] sm:$0xff]
    %v30 = vld [vmem:[%s1] sm:$0xff]
    %v31 = vld [vmem:[%s1 + $0x8] sm:$0xff]
    %v32 = vld [vmem:[%s1 + $0x10] sm:$0xff]
    %v33 = vld [vmem:[%s1 + $0x18] sm:$0xff]
    %v34 = vld [vmem:[%s2] sm:$0xff]
    %v35 = vld [vmem:[%s2 + $0x8] sm:$0xff]
    %v36 = vld [vmem:[%s2 + $0x10] sm:$0xff]
    %v37 = vld [vmem:[%s2 + $0x18] sm:$0xff]
    %39 = vset.pattern.permute.xlu0 0
    %40 = vperm.xlu0 %39, %v34
    %v41 = vpop.permute.xlu0 %40
    %44 = vset.pattern.permute.xlu0 0
    %45 = vperm.xlu0 %44, %v35
    %v46 = vpop.permute.xlu0 %45
    %49 = vset.pattern.permute.xlu0 0
    %50 = vperm.xlu0 %49, %v36
    %v51 = vpop.permute.xlu0 %50
    %54 = vset.pattern.permute.xlu0 0
    %55 = vperm.xlu0 %54, %v37
    %v56 = vpop.permute.xlu0 %55
    %vm58 = vcmask 64512
    %v60 = vsel %vm58, %v30, 0
    %v63 = vsel %vm58, %v31, 0
    %v66 = vsel %vm58, %v32, 0
    %v69 = vsel %vm58, %v33, 0
    %71 = vmatprep.subr.mxu0 0.0
    %72 = vmatpush1.msra.mxu0 %v29
    %73 = vmatprep.subr.mxu0 0.0
    %74 = vmatpush1.msra.mxu0 0.0
    %75 = vmatprep.subr.mxu0 0.0
    %76 = vmatpush1.msra.mxu0 0.0
    %77 = vmatprep.subr.mxu0 0.0
    %78 = vmatpush1.msra.mxu0 0.0
    %79 = vmatprep.subr.mxu0 0.0
    %80 = vmatpush1.msra.mxu0 0.0
    %81 = vmatprep.subr.mxu0 0.0
    %82 = vmatpush1.msra.mxu0 0.0
    %83 = vmatprep.subr.mxu0 0.0
    %84 = vmatpush1.msra.mxu0 0.0
    %85 = vmatprep.subr.mxu0 0.0
    %86 = vmatpush1.msra.mxu0 0.0
    %87 = vmatprep.subr.mxu0 0.0
    %88 = vmatpush1.msra.mxu0 0.0
    %89 = vmatprep.subr.mxu0 0.0
    %90 = vmatpush1.msra.mxu0 0.0
    %91 = vmatprep.subr.mxu0 0.0
    %92 = vmatpush1.msra.mxu0 0.0
    %93 = vmatprep.subr.mxu0 0.0
    %94 = vmatpush1.msra.mxu0 0.0
    %95 = vmatprep.subr.mxu0 0.0
    %96 = vmatpush1.msra.mxu0 0.0
    %97 = vmatprep.subr.mxu0 0.0
    %98 = vmatpush1.msra.mxu0 0.0
    %99 = vmatprep.subr.mxu0 0.0
    %100 = vmatpush1.msra.mxu0 0.0
    %101 = vmatprep.subr.mxu0 0.0
    %102 = vmatpush1.msra.mxu0 0.0
    %103 = vmatprep.subr.mxu0 0.0
    %104 = vmatpush1.msra.mxu0 0.0
    %105 = vmatprep.subr.mxu0 0.0
    %106 = vmatpush1.msra.mxu0 0.0
    %107 = vmatprep.subr.mxu0 0.0
    %108 = vmatpush1.msra.mxu0 0.0
    %109 = vmatprep.subr.mxu0 0.0
    %110 = vmatpush1.msra.mxu0 0.0
    %111 = vmatprep.subr.mxu0 0.0
    %112 = vmatpush1.msra.mxu0 0.0
    %113 = vmatprep.subr.mxu0 0.0
    %114 = vmatpush1.msra.mxu0 0.0
    %115 = vmatprep.subr.mxu0 0.0
    %116 = vmatpush1.msra.mxu0 0.0
    %117 = vmatprep.subr.mxu0 0.0
    %118 = vmatpush1.msra.mxu0 0.0
    %119 = vmatprep.subr.mxu0 0.0
    %120 = vmatpush1.msra.mxu0 0.0
    %121 = vmatprep.subr.mxu0 0.0
    %122 = vmatpush1.msra.mxu0 0.0
    %123 = vmatprep.subr.mxu0 0.0
    %124 = vmatpush1.msra.mxu0 0.0
    %125 = vmatprep.subr.mxu0 0.0
    %126 = vmatpush1.msra.mxu0 0.0
    %127 = vmatprep.subr.mxu0 0.0
    %128 = vmatpush1.msra.mxu0 0.0
    %129 = vmatprep.subr.mxu0 0.0
    %130 = vmatpush1.msra.mxu0 0.0
    %131 = vmatprep.subr.mxu0 0.0
    %132 = vmatpush1.msra.mxu0 0.0
    %133 = vmatprep.subr.mxu0 0.0
    %134 = vmatpush1.msra.mxu0 0.0
    %135 = vmatprep.mubr.f32.mxu0 0.0
    %136 = vmatmul.mubr.f32.gmra.mrb[0].mxu0 %v60
    %v137 = vpop.f32.mrb[0].mxu0
    %v138 = vadd.f32 %v41, %v137
    %v139 = vpop.f32.mrb[0].mxu0
    %140 = vmatprep.mubr.f32.mxu0 0.0
    %141 = vmatmul.mubr.f32.gmra.mrb[0].mxu0 %v63
    %v142 = vpop.f32.mrb[0].mxu0
    %v143 = vadd.f32 %v46, %v142
    %v144 = vpop.f32.mrb[0].mxu0
    %145 = vmatprep.mubr.f32.mxu0 0.0
    %146 = vmatmul.mubr.f32.gmra.mrb[0].mxu0 %v66
    %v147 = vpop.f32.mrb[0].mxu0
    %v148 = vadd.f32 %v51, %v147
    %v149 = vpop.f32.mrb[0].mxu0
    %150 = vmatprep.mubr.f32.mxu0 0.0
    %151 = vmatmul.mubr.f32.gmra.mrb[0].mxu0 %v69
    %v152 = vpop.f32.mrb[0].mxu0
    %v153 = vadd.f32 %v56, %v152
    %v154 = vpop.f32.mrb[0].mxu0
    %155 = vdwg.mxu0
    %v156 = vmax.f32 %v138, 0.0
    %v157 = vmax.f32 %v143, 0.0
    %v158 = vmax.f32 %v148, 0.0
    %v159 = vmax.f32 %v153, 0.0
    %v160 = vld [vmem:[%s3] sm:$0xff]
    %v161 = vld [vmem:[%s3 + $0x8] sm:$0xff]
    %v162 = vld [vmem:[%s3 + $0x10] sm:$0xff]
    %v163 = vld [vmem:[%s3 + $0x18] sm:$0xff]
    %v164 = vld [vmem:[%s4] sm:$0xff]
    %v165 = vld [vmem:[%s4 + $0x8] sm:$0xff]
    %v166 = vld [vmem:[%s4 + $0x10] sm:$0xff]
    %v167 = vld [vmem:[%s4 + $0x18] sm:$0xff]
    %169 = vset.pattern.permute.xlu0 0
    %170 = vperm.xlu0 %169, %v164
    %v171 = vpop.permute.xlu0 %170
    %174 = vset.pattern.permute.xlu0 0
    %175 = vperm.xlu0 %174, %v165
    %v176 = vpop.permute.xlu0 %175
    %179 = vset.pattern.permute.xlu0 0
    %180 = vperm.xlu0 %179, %v166
    %v181 = vpop.permute.xlu0 %180
    %184 = vset.pattern.permute.xlu0 0
    %185 = vperm.xlu0 %184, %v167
    %v186 = vpop.permute.xlu0 %185
    %vm188 = vcmask 261120
    %v190 = vsel %vm188, %v160, 0
    %v193 = vsel %vm188, %v161, 0
    %v196 = vsel %vm188, %v162, 0
    %v199 = vsel %vm188, %v163, 0
    %201 = vmatprep.subr.mxu0 0.0
    %202 = vmatpush1.msra.mxu0 %v156
    %203 = vmatprep.subr.mxu0 0.0
    %204 = vmatpush1.msra.mxu0 %v157
    %205 = vmatprep.subr.mxu0 0.0
    %206 = vmatpush1.msra.mxu0 %v158
    %207 = vmatprep.subr.mxu0 0.0
    %208 = vmatpush1.msra.mxu0 %v159
    %209 = vmatprep.subr.mxu0 0.0
    %210 = vmatpush1.msra.mxu0 0.0
    %211 = vmatprep.subr.mxu0 0.0
    %212 = vmatpush1.msra.mxu0 0.0
    %213 = vmatprep.subr.mxu0 0.0
    %214 = vmatpush1.msra.mxu0 0.0
    %215 = vmatprep.subr.mxu0 0.0
    %216 = vmatpush1.msra.mxu0 0.0
    %217 = vmatprep.subr.mxu0 0.0
    %218 = vmatpush1.msra.mxu0 0.0
    %219 = vmatprep.subr.mxu0 0.0
    %220 = vmatpush1.msra.mxu0 0.0
    %221 = vmatprep.subr.mxu0 0.0
    %222 = vmatpush1.msra.mxu0 0.0
    %223 = vmatprep.subr.mxu0 0.0
    %224 = vmatpush1.msra.mxu0 0.0
    %225 = vmatprep.subr.mxu0 0.0
    %226 = vmatpush1.msra.mxu0 0.0
    %227 = vmatprep.subr.mxu0 0.0
    %228 = vmatpush1.msra.mxu0 0.0
    %229 = vmatprep.subr.mxu0 0.0
    %230 = vmatpush1.msra.mxu0 0.0
    %231 = vmatprep.subr.mxu0 0.0
    %232 = vmatpush1.msra.mxu0 0.0
    %233 = vmatprep.subr.mxu0 0.0
    %234 = vmatpush1.msra.mxu0 0.0
    %235 = vmatprep.subr.mxu0 0.0
    %236 = vmatpush1.msra.mxu0 0.0
    %237 = vmatprep.subr.mxu0 0.0
    %238 = vmatpush1.msra.mxu0 0.0
    %239 = vmatprep.subr.mxu0 0.0
    %240 = vmatpush1.msra.mxu0 0.0
    %241 = vmatprep.subr.mxu0 0.0
    %242 = vmatpush1.msra.mxu0 0.0
    %243 = vmatprep.subr.mxu0 0.0
    %244 = vmatpush1.msra.mxu0 0.0
    %245 = vmatprep.subr.mxu0 0.0
    %246 = vmatpush1.msra.mxu0 0.0
    %247 = vmatprep.subr.mxu0 0.0
    %248 = vmatpush1.msra.mxu0 0.0
    %249 = vmatprep.subr.mxu0 0.0
    %250 = vmatpush1.msra.mxu0 0.0
    %251 = vmatprep.subr.mxu0 0.0
    %252 = vmatpush1.msra.mxu0 0.0
    %253 = vmatprep.subr.mxu0 0.0
    %254 = vmatpush1.msra.mxu0 0.0
    %255 = vmatprep.subr.mxu0 0.0
    %256 = vmatpush1.msra.mxu0 0.0
    %257 = vmatprep.subr.mxu0 0.0
    %258 = vmatpush1.msra.mxu0 0.0
    %259 = vmatprep.subr.mxu0 0.0
    %260 = vmatpush1.msra.mxu0 0.0
    %261 = vmatprep.subr.mxu0 0.0
    %262 = vmatpush1.msra.mxu0 0.0
    %263 = vmatprep.subr.mxu0 0.0
    %264 = vmatpush1.msra.mxu0 0.0
    %265 = vmatprep.mubr.f32.mxu0 0.0
    %266 = vmatmul.mubr.f32.gmra.mrb[0].mxu0 %v190
    %v267 = vpop.f32.mrb[0].mxu0
    %v268 = vadd.f32 %v171, %v267
    %v269 = vpop.f32.mrb[0].mxu0
    %270 = vmatprep.mubr.f32.mxu0 0.0
    %271 = vmatmul.mubr.f32.gmra.mrb[0].mxu0 %v193
    %v272 = vpop.f32.mrb[0].mxu0
    %v273 = vadd.f32 %v176, %v272
    %v274 = vpop.f32.mrb[0].mxu0
    %275 = vmatprep.mubr.f32.mxu0 0.0
    %276 = vmatmul.mubr.f32.gmra.mrb[0].mxu0 %v196
    %v277 = vpop.f32.mrb[0].mxu0
    %v278 = vadd.f32 %v181, %v277
    %v279 = vpop.f32.mrb[0].mxu0
    %280 = vmatprep.mubr.f32.mxu0 0.0
    %281 = vmatmul.mubr.f32.gmra.mrb[0].mxu0 %v199
    %v282 = vpop.f32.mrb[0].mxu0
    %v283 = vadd.f32 %v186, %v282
    %v284 = vpop.f32.mrb[0].mxu0
    %285 = vdwg.mxu0
    %v286 = vmax.f32 %v268, 0.0
    %v287 = vmax.f32 %v273, 0.0
    %v288 = vmax.f32 %v278, 0.0
    %v289 = vmax.f32 %v283, 0.0
    %s290 = scalar_lea.vmem %s3, 32
    %v291 = vld [vmem:[%s290] sm:$0xff]
    %v292 = vld [vmem:[%s290 + $0x8] sm:$0xff]
    %v293 = vld [vmem:[%s290 + $0x10] sm:$0xff]
    %v294 = vld [vmem:[%s290 + $0x18] sm:$0xff]
    %s295 = scalar_lea.vmem %s4, 32
    %v296 = vld [vmem:[%s295] sm:$0xff]
    %v297 = vld [vmem:[%s295 + $0x8] sm:$0xff]
    %v298 = vld [vmem:[%s295 + $0x10] sm:$0xff]
    %v299 = vld [vmem:[%s295 + $0x18] sm:$0xff]
    %301 = vset.pattern.permute.xlu0 0
    %302 = vperm.xlu0 %301, %v296
    %v303 = vpop.permute.xlu0 %302
    %306 = vset.pattern.permute.xlu0 0
    %307 = vperm.xlu0 %306, %v297
    %v308 = vpop.permute.xlu0 %307
    %311 = vset.pattern.permute.xlu0 0
    %312 = vperm.xlu0 %311, %v298
    %v313 = vpop.permute.xlu0 %312
    %316 = vset.pattern.permute.xlu0 0
    %317 = vperm.xlu0 %316, %v299
    %v318 = vpop.permute.xlu0 %317
    %v321 = vsel %vm188, %v291, 0
    %v324 = vsel %vm188, %v292, 0
    %v327 = vsel %vm188, %v293, 0
    %v330 = vsel %vm188, %v294, 0
    %332 = vmatprep.subr.mxu0 0.0
    %333 = vmatpush1.msra.mxu0 %v286
    %334 = vmatprep.subr.mxu0 0.0
    %335 = vmatpush1.msra.mxu0 %v287
    %336 = vmatprep.subr.mxu0 0.0
    %337 = vmatpush1.msra.mxu0 %v288
    %338 = vmatprep.subr.mxu0 0.0
    %339 = vmatpush1.msra.mxu0 %v289
    %340 = vmatprep.subr.mxu0 0.0
    %341 = vmatpush1.msra.mxu0 0.0
    %342 = vmatprep.subr.mxu0 0.0
    %343 = vmatpush1.msra.mxu0 0.0
    %344 = vmatprep.subr.mxu0 0.0
    %345 = vmatpush1.msra.mxu0 0.0
    %346 = vmatprep.subr.mxu0 0.0
    %347 = vmatpush1.msra.mxu0 0.0
    %348 = vmatprep.subr.mxu0 0.0
    %349 = vmatpush1.msra.mxu0 0.0
    %350 = vmatprep.subr.mxu0 0.0
    %351 = vmatpush1.msra.mxu0 0.0
    %352 = vmatprep.subr.mxu0 0.0
    %353 = vmatpush1.msra.mxu0 0.0
    %354 = vmatprep.subr.mxu0 0.0
    %355 = vmatpush1.msra.mxu0 0.0
    %356 = vmatprep.subr.mxu0 0.0
    %357 = vmatpush1.msra.mxu0 0.0
    %358 = vmatprep.subr.mxu0 0.0
    %359 = vmatpush1.msra.mxu0 0.0
    %360 = vmatprep.subr.mxu0 0.0
    %361 = vmatpush1.msra.mxu0 0.0
    %362 = vmatprep.subr.mxu0 0.0
    %363 = vmatpush1.msra.mxu0 0.0
    %364 = vmatprep.subr.mxu0 0.0
    %365 = vmatpush1.msra.mxu0 0.0
    %366 = vmatprep.subr.mxu0 0.0
    %367 = vmatpush1.msra.mxu0 0.0
    %368 = vmatprep.subr.mxu0 0.0
    %369 = vmatpush1.msra.mxu0 0.0
    %370 = vmatprep.subr.mxu0 0.0
    %371 = vmatpush1.msra.mxu0 0.0
    %372 = vmatprep.subr.mxu0 0.0
    %373 = vmatpush1.msra.mxu0 0.0
    %374 = vmatprep.subr.mxu0 0.0
    %375 = vmatpush1.msra.mxu0 0.0
    %376 = vmatprep.subr.mxu0 0.0
    %377 = vmatpush1.msra.mxu0 0.0
    %378 = vmatprep.subr.mxu0 0.0
    %379 = vmatpush1.msra.mxu0 0.0
    %380 = vmatprep.subr.mxu0 0.0
    %381 = vmatpush1.msra.mxu0 0.0
    %382 = vmatprep.subr.mxu0 0.0
    %383 = vmatpush1.msra.mxu0 0.0
    %384 = vmatprep.subr.mxu0 0.0
    %385 = vmatpush1.msra.mxu0 0.0
    %386 = vmatprep.subr.mxu0 0.0
    %387 = vmatpush1.msra.mxu0 0.0
    %388 = vmatprep.subr.mxu0 0.0
    %389 = vmatpush1.msra.mxu0 0.0
    %390 = vmatprep.subr.mxu0 0.0
    %391 = vmatpush1.msra.mxu0 0.0
    %392 = vmatprep.subr.mxu0 0.0
    %393 = vmatpush1.msra.mxu0 0.0
    %394 = vmatprep.subr.mxu0 0.0
    %395 = vmatpush1.msra.mxu0 0.0
    %396 = vmatprep.mubr.f32.mxu0 0.0
    %397 = vmatmul.mubr.f32.gmra.mrb[0].mxu0 %v321
    %v398 = vpop.f32.mrb[0].mxu0
    %v399 = vadd.f32 %v303, %v398
    %v400 = vpop.f32.mrb[0].mxu0
    %401 = vmatprep.mubr.f32.mxu0 0.0
    %402 = vmatmul.mubr.f32.gmra.mrb[0].mxu0 %v324
    %v403 = vpop.f32.mrb[0].mxu0
    %v404 = vadd.f32 %v308, %v403
    %v405 = vpop.f32.mrb[0].mxu0
    %406 = vmatprep.mubr.f32.mxu0 0.0
    %407 = vmatmul.mubr.f32.gmra.mrb[0].mxu0 %v327
    %v408 = vpop.f32.mrb[0].mxu0
    %v409 = vadd.f32 %v313, %v408
    %v410 = vpop.f32.mrb[0].mxu0
    %411 = vmatprep.mubr.f32.mxu0 0.0
    %412 = vmatmul.mubr.f32.gmra.mrb[0].mxu0 %v330
    %v413 = vpop.f32.mrb[0].mxu0
    %v414 = vadd.f32 %v318, %v413
    %v415 = vpop.f32.mrb[0].mxu0
    %416 = vdwg.mxu0
    %v417 = vmax.f32 %v399, 0.0
    %v418 = vmax.f32 %v404, 0.0
    %v419 = vmax.f32 %v409, 0.0
    %v420 = vmax.f32 %v414, 0.0
    %s421 = scalar_lea.vmem %s3, 64
    %v422 = vld [vmem:[%s421] sm:$0xff]
    %v423 = vld [vmem:[%s421 + $0x8] sm:$0xff]
    %v424 = vld [vmem:[%s421 + $0x10] sm:$0xff]
    %v425 = vld [vmem:[%s421 + $0x18] sm:$0xff]
    %s426 = scalar_lea.vmem %s4, 64
    %v427 = vld [vmem:[%s426] sm:$0xff]
    %v428 = vld [vmem:[%s426 + $0x8] sm:$0xff]
    %v429 = vld [vmem:[%s426 + $0x10] sm:$0xff]
    %v430 = vld [vmem:[%s426 + $0x18] sm:$0xff]
    %432 = vset.pattern.permute.xlu0 0
    %433 = vperm.xlu0 %432, %v427
    %v434 = vpop.permute.xlu0 %433
    %437 = vset.pattern.permute.xlu0 0
    %438 = vperm.xlu0 %437, %v428
    %v439 = vpop.permute.xlu0 %438
    %442 = vset.pattern.permute.xlu0 0
    %443 = vperm.xlu0 %442, %v429
    %v444 = vpop.permute.xlu0 %443
    %447 = vset.pattern.permute.xlu0 0
    %448 = vperm.xlu0 %447, %v430
    %v449 = vpop.permute.xlu0 %448
    %v452 = vsel %vm188, %v422, 0
    %v455 = vsel %vm188, %v423, 0
    %v458 = vsel %vm188, %v424, 0
    %v461 = vsel %vm188, %v425, 0
    %463 = vmatprep.subr.mxu0 0.0
    %464 = vmatpush1.msra.mxu0 %v417
    %465 = vmatprep.subr.mxu0 0.0
    %466 = vmatpush1.msra.mxu0 %v418
    %467 = vmatprep.subr.mxu0 0.0
    %468 = vmatpush1.msra.mxu0 %v419
    %469 = vmatprep.subr.mxu0 0.0
    %470 = vmatpush1.msra.mxu0 %v420
    %471 = vmatprep.subr.mxu0 0.0
    %472 = vmatpush1.msra.mxu0 0.0
    %473 = vmatprep.subr.mxu0 0.0
    %474 = vmatpush1.msra.mxu0 0.0
    %475 = vmatprep.subr.mxu0 0.0
    %476 = vmatpush1.msra.mxu0 0.0
    %477 = vmatprep.subr.mxu0 0.0
    %478 = vmatpush1.msra.mxu0 0.0
    %479 = vmatprep.subr.mxu0 0.0
    %480 = vmatpush1.msra.mxu0 0.0
    %481 = vmatprep.subr.mxu0 0.0
    %482 = vmatpush1.msra.mxu0 0.0
    %483 = vmatprep.subr.mxu0 0.0
    %484 = vmatpush1.msra.mxu0 0.0
    %485 = vmatprep.subr.mxu0 0.0
    %486 = vmatpush1.msra.mxu0 0.0
    %487 = vmatprep.subr.mxu0 0.0
    %488 = vmatpush1.msra.mxu0 0.0
    %489 = vmatprep.subr.mxu0 0.0
    %490 = vmatpush1.msra.mxu0 0.0
    %491 = vmatprep.subr.mxu0 0.0
    %492 = vmatpush1.msra.mxu0 0.0
    %493 = vmatprep.subr.mxu0 0.0
    %494 = vmatpush1.msra.mxu0 0.0
    %495 = vmatprep.subr.mxu0 0.0
    %496 = vmatpush1.msra.mxu0 0.0
    %497 = vmatprep.subr.mxu0 0.0
    %498 = vmatpush1.msra.mxu0 0.0
    %499 = vmatprep.subr.mxu0 0.0
    %500 = vmatpush1.msra.mxu0 0.0
    %501 = vmatprep.subr.mxu0 0.0
    %502 = vmatpush1.msra.mxu0 0.0
    %503 = vmatprep.subr.mxu0 0.0
    %504 = vmatpush1.msra.mxu0 0.0
    %505 = vmatprep.subr.mxu0 0.0
    %506 = vmatpush1.msra.mxu0 0.0
    %507 = vmatprep.subr.mxu0 0.0
    %508 = vmatpush1.msra.mxu0 0.0
    %509 = vmatprep.subr.mxu0 0.0
    %510 = vmatpush1.msra.mxu0 0.0
    %511 = vmatprep.subr.mxu0 0.0
    %512 = vmatpush1.msra.mxu0 0.0
    %513 = vmatprep.subr.mxu0 0.0
    %514 = vmatpush1.msra.mxu0 0.0
    %515 = vmatprep.subr.mxu0 0.0
    %516 = vmatpush1.msra.mxu0 0.0
    %517 = vmatprep.subr.mxu0 0.0
    %518 = vmatpush1.msra.mxu0 0.0
    %519 = vmatprep.subr.mxu0 0.0
    %520 = vmatpush1.msra.mxu0 0.0
    %521 = vmatprep.subr.mxu0 0.0
    %522 = vmatpush1.msra.mxu0 0.0
    %523 = vmatprep.subr.mxu0 0.0
    %524 = vmatpush1.msra.mxu0 0.0
    %525 = vmatprep.subr.mxu0 0.0
    %526 = vmatpush1.msra.mxu0 0.0
    %527 = vmatprep.mubr.f32.mxu0 0.0
    %528 = vmatmul.mubr.f32.gmra.mrb[0].mxu0 %v452
    %v529 = vpop.f32.mrb[0].mxu0
    %v530 = vadd.f32 %v434, %v529
    %v531 = vpop.f32.mrb[0].mxu0
    %532 = vmatprep.mubr.f32.mxu0 0.0
    %533 = vmatmul.mubr.f32.gmra.mrb[0].mxu0 %v455
    %v534 = vpop.f32.mrb[0].mxu0
    %v535 = vadd.f32 %v439, %v534
    %v536 = vpop.f32.mrb[0].mxu0
    %537 = vmatprep.mubr.f32.mxu0 0.0
    %538 = vmatmul.mubr.f32.gmra.mrb[0].mxu0 %v458
    %v539 = vpop.f32.mrb[0].mxu0
    %v540 = vadd.f32 %v444, %v539
    %v541 = vpop.f32.mrb[0].mxu0
    %542 = vmatprep.mubr.f32.mxu0 0.0
    %543 = vmatmul.mubr.f32.gmra.mrb[0].mxu0 %v461
    %v544 = vpop.f32.mrb[0].mxu0
    %v545 = vadd.f32 %v449, %v544
    %v546 = vpop.f32.mrb[0].mxu0
    %547 = vdwg.mxu0
    %v548 = vmax.f32 %v530, 0.0
    %v549 = vmax.f32 %v535, 0.0
    %v550 = vmax.f32 %v540, 0.0
    %v551 = vmax.f32 %v545, 0.0
    %s552 = scalar_lea.vmem %s3, 96
    %v553 = vld [vmem:[%s552] sm:$0xff]
    %v554 = vld [vmem:[%s552 + $0x8] sm:$0xff]
    %v555 = vld [vmem:[%s552 + $0x10] sm:$0xff]
    %v556 = vld [vmem:[%s552 + $0x18] sm:$0xff]
    %s557 = scalar_lea.vmem %s4, 96
    %v558 = vld [vmem:[%s557] sm:$0xff]
    %v559 = vld [vmem:[%s557 + $0x8] sm:$0xff]
    %v560 = vld [vmem:[%s557 + $0x10] sm:$0xff]
    %v561 = vld [vmem:[%s557 + $0x18] sm:$0xff]
    %563 = vset.pattern.permute.xlu0 0
    %564 = vperm.xlu0 %563, %v558
    %v565 = vpop.permute.xlu0 %564
    %568 = vset.pattern.permute.xlu0 0
    %569 = vperm.xlu0 %568, %v559
    %v570 = vpop.permute.xlu0 %569
    %573 = vset.pattern.permute.xlu0 0
    %574 = vperm.xlu0 %573, %v560
    %v575 = vpop.permute.xlu0 %574
    %578 = vset.pattern.permute.xlu0 0
    %579 = vperm.xlu0 %578, %v561
    %v580 = vpop.permute.xlu0 %579
    %v583 = vsel %vm188, %v553, 0
    %v586 = vsel %vm188, %v554, 0
    %v589 = vsel %vm188, %v555, 0
    %v592 = vsel %vm188, %v556, 0
    %594 = vmatprep.subr.mxu0 0.0
    %595 = vmatpush1.msra.mxu0 %v548
    %596 = vmatprep.subr.mxu0 0.0
    %597 = vmatpush1.msra.mxu0 %v549
    %598 = vmatprep.subr.mxu0 0.0
    %599 = vmatpush1.msra.mxu0 %v550
    %600 = vmatprep.subr.mxu0 0.0
    %601 = vmatpush1.msra.mxu0 %v551
    %602 = vmatprep.subr.mxu0 0.0
    %603 = vmatpush1.msra.mxu0 0.0
    %604 = vmatprep.subr.mxu0 0.0
    %605 = vmatpush1.msra.mxu0 0.0
    %606 = vmatprep.subr.mxu0 0.0
    %607 = vmatpush1.msra.mxu0 0.0
    %608 = vmatprep.subr.mxu0 0.0
    %609 = vmatpush1.msra.mxu0 0.0
    %610 = vmatprep.subr.mxu0 0.0
    %611 = vmatpush1.msra.mxu0 0.0
    %612 = vmatprep.subr.mxu0 0.0
    %613 = vmatpush1.msra.mxu0 0.0
    %614 = vmatprep.subr.mxu0 0.0
    %615 = vmatpush1.msra.mxu0 0.0
    %616 = vmatprep.subr.mxu0 0.0
    %617 = vmatpush1.msra.mxu0 0.0
    %618 = vmatprep.subr.mxu0 0.0
    %619 = vmatpush1.msra.mxu0 0.0
    %620 = vmatprep.subr.mxu0 0.0
    %621 = vmatpush1.msra.mxu0 0.0
    %622 = vmatprep.subr.mxu0 0.0
    %623 = vmatpush1.msra.mxu0 0.0
    %624 = vmatprep.subr.mxu0 0.0
    %625 = vmatpush1.msra.mxu0 0.0
    %626 = vmatprep.subr.mxu0 0.0
    %627 = vmatpush1.msra.mxu0 0.0
    %628 = vmatprep.subr.mxu0 0.0
    %629 = vmatpush1.msra.mxu0 0.0
    %630 = vmatprep.subr.mxu0 0.0
    %631 = vmatpush1.msra.mxu0 0.0
    %632 = vmatprep.subr.mxu0 0.0
    %633 = vmatpush1.msra.mxu0 0.0
    %634 = vmatprep.subr.mxu0 0.0
    %635 = vmatpush1.msra.mxu0 0.0
    %636 = vmatprep.subr.mxu0 0.0
    %637 = vmatpush1.msra.mxu0 0.0
    %638 = vmatprep.subr.mxu0 0.0
    %639 = vmatpush1.msra.mxu0 0.0
    %640 = vmatprep.subr.mxu0 0.0
    %641 = vmatpush1.msra.mxu0 0.0
    %642 = vmatprep.subr.mxu0 0.0
    %643 = vmatpush1.msra.mxu0 0.0
    %644 = vmatprep.subr.mxu0 0.0
    %645 = vmatpush1.msra.mxu0 0.0
    %646 = vmatprep.subr.mxu0 0.0
    %647 = vmatpush1.msra.mxu0 0.0
    %648 = vmatprep.subr.mxu0 0.0
    %649 = vmatpush1.msra.mxu0 0.0
    %650 = vmatprep.subr.mxu0 0.0
    %651 = vmatpush1.msra.mxu0 0.0
    %652 = vmatprep.subr.mxu0 0.0
    %653 = vmatpush1.msra.mxu0 0.0
    %654 = vmatprep.subr.mxu0 0.0
    %655 = vmatpush1.msra.mxu0 0.0
    %656 = vmatprep.subr.mxu0 0.0
    %657 = vmatpush1.msra.mxu0 0.0
    %658 = vmatprep.mubr.f32.mxu0 0.0
    %659 = vmatmul.mubr.f32.gmra.mrb[0].mxu0 %v583
    %v660 = vpop.f32.mrb[0].mxu0
    %v661 = vadd.f32 %v565, %v660
    %v662 = vpop.f32.mrb[0].mxu0
    %663 = vmatprep.mubr.f32.mxu0 0.0
    %664 = vmatmul.mubr.f32.gmra.mrb[0].mxu0 %v586
    %v665 = vpop.f32.mrb[0].mxu0
    %v666 = vadd.f32 %v570, %v665
    %v667 = vpop.f32.mrb[0].mxu0
    %668 = vmatprep.mubr.f32.mxu0 0.0
    %669 = vmatmul.mubr.f32.gmra.mrb[0].mxu0 %v589
    %v670 = vpop.f32.mrb[0].mxu0
    %v671 = vadd.f32 %v575, %v670
    %v672 = vpop.f32.mrb[0].mxu0
    %673 = vmatprep.mubr.f32.mxu0 0.0
    %674 = vmatmul.mubr.f32.gmra.mrb[0].mxu0 %v592
    %v675 = vpop.f32.mrb[0].mxu0
    %v676 = vadd.f32 %v580, %v675
    %v677 = vpop.f32.mrb[0].mxu0
    %678 = vdwg.mxu0
    %v679 = vmax.f32 %v661, 0.0
    %v680 = vmax.f32 %v666, 0.0
    %v681 = vmax.f32 %v671, 0.0
    %v682 = vmax.f32 %v676, 0.0
    %v683 = vld [vmem:[%s5] sm:$0x1]
    %v684 = vld [vmem:[#allocation2] sm:$0x1]
    %686 = vset.pattern.permute.xlu0 0
    %687 = vperm.xlu0 %686, %v684
    %v688 = vpop.permute.xlu0 %687
    %v690 = vlaneseq
    %v691 = vshrl.u32 %v690, 7
    %v692 = vsub.s32 0, %v691
    %v693 = vrot.slane %v688, %v692
    %v695 = vsel %vm188, %v683, 0
    %697 = vmatprep.subr.mxu0 0.0
    %698 = vmatpush1.msra.mxu0 %v679
    %699 = vmatprep.subr.mxu0 0.0
    %700 = vmatpush1.msra.mxu0 %v680
    %701 = vmatprep.subr.mxu0 0.0
    %702 = vmatpush1.msra.mxu0 %v681
    %703 = vmatprep.subr.mxu0 0.0
    %704 = vmatpush1.msra.mxu0 %v682
    %705 = vmatprep.subr.mxu0 0.0
    %706 = vmatpush1.msra.mxu0 0.0
    %707 = vmatprep.subr.mxu0 0.0
    %708 = vmatpush1.msra.mxu0 0.0
    %709 = vmatprep.subr.mxu0 0.0
    %710 = vmatpush1.msra.mxu0 0.0
    %711 = vmatprep.subr.mxu0 0.0
    %712 = vmatpush1.msra.mxu0 0.0
    %713 = vmatprep.subr.mxu0 0.0
    %714 = vmatpush1.msra.mxu0 0.0
    %715 = vmatprep.subr.mxu0 0.0
    %716 = vmatpush1.msra.mxu0 0.0
    %717 = vmatprep.subr.mxu0 0.0
    %718 = vmatpush1.msra.mxu0 0.0
    %719 = vmatprep.subr.mxu0 0.0
    %720 = vmatpush1.msra.mxu0 0.0
    %721 = vmatprep.subr.mxu0 0.0
    %722 = vmatpush1.msra.mxu0 0.0
    %723 = vmatprep.subr.mxu0 0.0
    %724 = vmatpush1.msra.mxu0 0.0
    %725 = vmatprep.subr.mxu0 0.0
    %726 = vmatpush1.msra.mxu0 0.0
    %727 = vmatprep.subr.mxu0 0.0
    %728 = vmatpush1.msra.mxu0 0.0
    %729 = vmatprep.subr.mxu0 0.0
    %730 = vmatpush1.msra.mxu0 0.0
    %731 = vmatprep.subr.mxu0 0.0
    %732 = vmatpush1.msra.mxu0 0.0
    %733 = vmatprep.subr.mxu0 0.0
    %734 = vmatpush1.msra.mxu0 0.0
    %735 = vmatprep.subr.mxu0 0.0
    %736 = vmatpush1.msra.mxu0 0.0
    %737 = vmatprep.subr.mxu0 0.0
    %738 = vmatpush1.msra.mxu0 0.0
    %739 = vmatprep.subr.mxu0 0.0
    %740 = vmatpush1.msra.mxu0 0.0
    %741 = vmatprep.subr.mxu0 0.0
    %742 = vmatpush1.msra.mxu0 0.0
    %743 = vmatprep.subr.mxu0 0.0
    %744 = vmatpush1.msra.mxu0 0.0
    %745 = vmatprep.subr.mxu0 0.0
    %746 = vmatpush1.msra.mxu0 0.0
    %747 = vmatprep.subr.mxu0 0.0
    %748 = vmatpush1.msra.mxu0 0.0
    %749 = vmatprep.subr.mxu0 0.0
    %750 = vmatpush1.msra.mxu0 0.0
    %751 = vmatprep.subr.mxu0 0.0
    %752 = vmatpush1.msra.mxu0 0.0
    %753 = vmatprep.subr.mxu0 0.0
    %754 = vmatpush1.msra.mxu0 0.0
    %755 = vmatprep.subr.mxu0 0.0
    %756 = vmatpush1.msra.mxu0 0.0
    %757 = vmatprep.subr.mxu0 0.0
    %758 = vmatpush1.msra.mxu0 0.0
    %759 = vmatprep.subr.mxu0 0.0
    %760 = vmatpush1.msra.mxu0 0.0
    %761 = vmatprep.mubr.f32.mxu0 0.0
    %762 = vmatmul.mubr.f32.gmra.mrb[0].mxu0 %v695
    %v763 = vpop.f32.mrb[0].mxu0
    %v764 = vadd.f32 %v693, %v763
    %v765 = vpop.f32.mrb[0].mxu0
    %766 = vdwg.mxu0
    %767 = vst [vmem:[#allocation3] sm:$0x1] %v764
    // Predicated region
    $region30: #{tpu_custom_call.1} parent=1 // pred_check
      _
    $region31: #{tpu_custom_call.1} parent=1 // pred_check_branch
      %769 = sbr.rel (0) target = $region33
    $region32: #{tpu_custom_call.1} parent=1 // pred_region
      %s771 = ssub.s32 16, 16
      %772 = vsyncadd [#allocation4], %s771
      %s774 = sshll.u32 [#allocation3], 4
      %s775 = int_to_ptr.vmem [resolvable:$true] %s774
      %777 = dma.vmem_to_hbm [thread:$0]  %s775, 16, %s7, [#allocation4]
    $region33: #{tpu_custom_call.1} parent=1 // pred_fallthru
      _
    // Predicated region
    $region34: #{tpu_custom_call.1} parent=1 // pred_check
      _
    $region35: #{tpu_custom_call.1} parent=1 // pred_check_branch
      %779 = sbr.rel (0) target = $region37
    $region36: #{tpu_custom_call.1} parent=1 // pred_region
      %780 = dma.done [#allocation4], 16
    $region37: #{tpu_custom_call.1} parent=1 // pred_fallthru
      _
    %781 = vsyncpa [#allocation4], 1

</llo_original>
